<compile_context>
chip_gen: v7x
topology: tpu7x:2x2x1
jax: 0.10.0
libtpu: 0.0.40
codegen_flags: <defaults>
</compile_context>

<pallas_src>
import math

import numpy as np
import jax
import jax.numpy as jnp
from jax import lax
from jax.experimental import pallas as pl
from jax.experimental.pallas import tpu as pltpu

# ------------------------- model hyper-params (small) -------------------------
N = 2            # batch
L = 8            # sequence length
E = 32           # embed size
H = 32           # hidden size (must equal E for the residual sa(x) + x)
HEADS = 4
D = H // HEADS   # head dim

NT = N * L           # tokens                      (16)
G = H // D           # lane chunks of width D      (4)
ST = G * NT          # stacked head-major rows     (64)  k = g*NT + r
LANES = 128
TPR = LANES // H     # tokens per dense output row (4)
DR = NT // TPR       # dense output rows           (4)

_VMEM = pl.BlockSpec(memory_space=pltpu.MemorySpace.VMEM)


# --------------------- constant matrices for the head split -------------------
def _head_constants():
    """0/1 matrices encoding torch's raw (N, L, H)->(N, heads, L, d) reshape."""
    k = np.arange(ST)
    r_of, g_of = k % NT, k // NT                 # token row / lane chunk of stacked idx k
    n_of, l_of = r_of // L, r_of % L
    flat = l_of * H + g_of * D                   # within-batch flat offset (x = 0)
    head_of = n_of * HEADS + flat // (L * D)     # global head id of stacked element k
    # additive attention mask: 0 within a head, -1e30 across heads
    mask = np.where(head_of[:, None] == head_of[None, :], 0.0, -1e30).astype(np.float32)
    # scatter of per-(head, query) weights back to the (NT, H) token layout:
    #   W2d[r, c] = w_stk[k]  with  r_of[k] == r  and  g_of[k] == c // D
    smat = (r_of[None, :] == np.arange(NT)[:, None]).astype(np.float32)                     # (NT, ST)
    tmat = (g_of[:, None] == (np.arange(H)[None, :] // D)).astype(np.float32)               # (ST, H)
    # lane-dense repack of the (NT, H) output into (DR, 128):
    #   dense[R, col] = out[TPR*R + col // H, col % H]
    repmat = (np.arange(LANES)[None, :] % H == np.arange(H)[:, None]).astype(np.float32)    # (H, 128)
    dmask = (np.arange(LANES)[None, :] // H ==
             (np.arange(NT)[:, None] % TPR)).astype(np.float32)                             # (NT, 128)
    amat = (np.arange(NT)[None, :] // TPR == np.arange(DR)[:, None]).astype(np.float32)     # (DR, NT)
    return mask, smat, tmat, repmat, dmask, amat


def prepare_params(p):
    """One-time static weight prep (hoisted out of the per-call path)."""
    inv = 1.0 / math.sqrt(float(H))
    wqkv = jnp.concatenate([p["wq"].T * inv, p["wk"].T * inv, p["wv"].T], axis=1)   # (E, 3H)
    bqkv = jnp.concatenate([p["bq"] * inv, p["bk"] * inv, p["bv"]]).reshape(1, 3 * H)
    mask, smat, tmat, repmat, dmask, amat = _head_constants()
    return dict(
        wqkv=wqkv, bqkv=bqkv,
        mask=jnp.asarray(mask), smat=jnp.asarray(smat), tmat=jnp.asarray(tmat),
        repmat=jnp.asarray(repmat), dmask=jnp.asarray(dmask), amat=jnp.asarray(amat),
        woT=p["wo"].T, bo=p["bo"].reshape(1, H),
        g1=p["g1"].reshape(1, H), b1=p["beta1"].reshape(1, H),
        wfT=p["wf"].T, bf=p["bf"].reshape(1, H),
    )


# ----------------------------- fused Pallas kernel -----------------------------
def encoder_kernel(x_ref, wqkv_ref, bqkv_ref, mask_ref, smat_ref, tmat_ref,
                   repmat_ref, dmask_ref, amat_ref,
                   wo_ref, bo_ref, g1_ref, b1_ref, wf_ref, bf_ref, o_ref):
    f32 = jnp.float32
    x = x_ref[...]                                                      # (NT, E)

    # ---- fused Q/K/V projection: one (NT, E) x (E, 3H) MXU matmul ----
    qkv = jnp.dot(x, wqkv_ref[...], preferred_element_type=f32) + bqkv_ref[...]
    q2d = qkv[:, 0 * H:1 * H]          # already scaled by 1/sqrt(H) via the weights
    k2d = qkv[:, 1 * H:2 * H]
    v2d = qkv[:, 2 * H:3 * H]

    # ---- head-major (ST, D) views: stacked row k = g*NT + r = token r, lanes [g*D, g*D+D) ----
    def stack_chunks(t):
        return jnp.concatenate([t[:, g * D:(g + 1) * D] for g in range(G)], axis=0)
    q_stk = stack_chunks(q2d)                                           # (ST, D)
    k_stk = stack_chunks(k2d)                                           # (ST, D)

    # ---- all (batch, head) score matrices in ONE MXU matmul + block mask ----
    s = lax.dot_general(q_stk, k_stk, (((1,), (1,)), ((), ())),
                        preferred_element_type=f32)                     # (ST, ST) [query, key]
    s = s + mask_ref[...]                                               # -1e30 across heads
    # softmax over the *query* axis (torch softmax(dim=2)), per key column
    m = jnp.max(s, axis=0, keepdims=True)                               # (1, ST)
    e = jnp.exp(s - m)
    inv_denom = 1.0 / jnp.sum(e, axis=0, keepdims=True)                 # (1, ST)
    # einsum('neab,neax->neax', P, V) == (sum_b P[a, b]) * V[a, :]
    w_stk = jnp.sum(e * inv_denom, axis=1, keepdims=True)               # (ST, 1)

    # scatter the per-(head, query) weights back to the (NT, H) token layout
    w2d = jnp.dot(smat_ref[...], w_stk * tmat_ref[...],
                  preferred_element_type=f32)                           # (NT, H)
    attn2d = w2d * v2d

    # ---- W_o projection + residual + LayerNorm1 (eps=1e-5, biased var, affine) ----
    sa = jnp.dot(attn2d, wo_ref[...], preferred_element_type=f32) + bo_ref[...]
    h = sa + x
    mu = jnp.mean(h, axis=-1, keepdims=True)
    var = jnp.mean(jnp.square(h - mu), axis=-1, keepdims=True)
    hn = (h - mu) * lax.rsqrt(var + 1e-5)
    hn = hn * g1_ref[...] + b1_ref[...]

    # ---- FFN (single Linear) + residual: this is the module's return value ----
    out = jnp.dot(hn, wf_ref[...], preferred_element_type=f32) + bf_ref[...] + hn   # (NT, H)

    # ---- lane-dense (DR, 128) store: dense[R, col] = out[TPR*R + col//H, col%H] ----
    wide = jnp.dot(out, repmat_ref[...], preferred_element_type=f32) * dmask_ref[...]   # (NT, 128)
    o_ref[...] = jnp.dot(amat_ref[...], wide, preferred_element_type=f32).astype(o_ref.dtype)


# ---------------------------------- wrapper ------------------------------------
@jax.jit
def encoder_block_pallas(x, prep):
    n, l, e = x.shape
    x2d = x.reshape(n * l, e)
    out_dense = pl.pallas_call(
        encoder_kernel,
        out_shape=jax.ShapeDtypeStruct((DR, LANES), jnp.float32),
        in_specs=[_VMEM] * 15,
        out_specs=_VMEM,
    )(x2d, prep["wqkv"], prep["bqkv"], prep["mask"], prep["smat"], prep["tmat"],
      prep["repmat"], prep["dmask"], prep["amat"],
      prep["woT"], prep["bo"], prep["g1"], prep["b1"], prep["wfT"], prep["bf"])
    return out_dense.reshape(n, l, H)


# --------------------------- pure-JAX reference --------------------------------
def encoder_block_ref(x, p):
    lin = lambda a, w, b: a @ w.T + b
    q = lin(x, p["wq"], p["bq"])
    k = lin(x, p["wk"], p["bk"])
    v = lin(x, p["wv"], p["bv"])
    n, l, h = q.shape
    q = q.reshape(n, HEADS, l, h // HEADS) / math.sqrt(float(h))
    k = k.reshape(n, HEADS, l, h // HEADS) / math.sqrt(float(h))
    v = v.reshape(n, HEADS, l, h // HEADS)
    s = jnp.einsum("neax,nebx->neab", q, k)
    pmat = jax.nn.softmax(s, axis=2)
    o = jnp.einsum("neab,neax->neax", pmat, v).reshape(n, l, h)
    sa = lin(o, p["wo"], p["bo"])
    hres = sa + x
    mu = hres.mean(-1, keepdims=True)
    var = ((hres - mu) ** 2).mean(-1, keepdims=True)
    hn = (hres - mu) / jnp.sqrt(var + 1e-5) * p["g1"] + p["beta1"]
    return lin(hn, p["wf"], p["bf"]) + hn


# ---------------------------------- main ---------------------------------------
def _init_params(key):
    ks = jax.random.split(key, 10)
    def lin_init(kw, kb, out_f, in_f):
        bound = 1.0 / math.sqrt(in_f)
        w = jax.random.uniform(kw, (out_f, in_f), jnp.float32, -bound, bound)
        b = jax.random.uniform(kb, (out_f,), jnp.float32, -bound, bound)
        return w, b
    wq, bq = lin_init(ks[0], ks[1], H, E)
    wk, bk = lin_init(ks[2], ks[3], H, E)
    wv, bv = lin_init(ks[4], ks[5], H, E)
    wo, bo = lin_init(ks[6], ks[7], H, H)
    wf, bf = lin_init(ks[8], ks[9], H, H)
    return dict(wq=wq, bq=bq, wk=wk, bk=bk, wv=wv, bv=bv, wo=wo, bo=bo,
                g1=jnp.ones((H,), jnp.float32), beta1=jnp.zeros((H,), jnp.float32),
                wf=wf, bf=bf)


if __name__ == "__main__":
    key = jax.random.PRNGKey(0)
    k_x, k_p = jax.random.split(key)
    x = jax.random.normal(k_x, (N, L, E), jnp.float32)
    params = _init_params(k_p)
    prep = prepare_params(params)   # one-time static weight / constant prep

    out = jax.block_until_ready(encoder_block_pallas(x, prep))
    ref = jax.block_until_ready(encoder_block_ref(x, params))

    assert out.shape == (N, L, H)
    assert jnp.allclose(out, ref, atol=1e-4, rtol=1e-4), (
        "mismatch vs reference: max abs err = %g" % float(jnp.max(jnp.abs(out - ref))))
    print("KERNEL_OK")
</pallas_src>

<mosaic_0001>
module attributes {stable_mosaic.version = 11 : i64} {
  func.func @encoder_kernel(%arg0: memref<16x32xf32, #tpu.memory_space<vmem>>, %arg1: memref<32x96xf32, #tpu.memory_space<vmem>>, %arg2: memref<1x96xf32, #tpu.memory_space<vmem>>, %arg3: memref<64x64xf32, #tpu.memory_space<vmem>>, %arg4: memref<16x64xf32, #tpu.memory_space<vmem>>, %arg5: memref<64x32xf32, #tpu.memory_space<vmem>>, %arg6: memref<32x128xf32, #tpu.memory_space<vmem>>, %arg7: memref<16x128xf32, #tpu.memory_space<vmem>>, %arg8: memref<4x16xf32, #tpu.memory_space<vmem>>, %arg9: memref<32x32xf32, #tpu.memory_space<vmem>>, %arg10: memref<1x32xf32, #tpu.memory_space<vmem>>, %arg11: memref<1x32xf32, #tpu.memory_space<vmem>>, %arg12: memref<1x32xf32, #tpu.memory_space<vmem>>, %arg13: memref<32x32xf32, #tpu.memory_space<vmem>>, %arg14: memref<1x32xf32, #tpu.memory_space<vmem>>, %arg15: memref<4x128xf32, #tpu.memory_space<vmem>>) attributes {dimension_semantics = [], scalar_prefetch = 0 : i64, scratch_operands = 0 : i64, tpu.core_type = #tpu.core_type<tc>} {
    %c0 = arith.constant 0 : index
    %c0_0 = arith.constant 0 : index
    %0 = vector.load %arg0[%c0, %c0_0] : memref<16x32xf32, #tpu.memory_space<vmem>>, vector<16x32xf32>
    %c0_1 = arith.constant 0 : index
    %c0_2 = arith.constant 0 : index
    %1 = vector.load %arg1[%c0_1, %c0_2] : memref<32x96xf32, #tpu.memory_space<vmem>>, vector<32x96xf32>
    %cst = arith.constant dense<0.000000e+00> : vector<16x96xf32>
    %2 = tpu.matmul %0, %1, %cst {dimension_numbers = #tpu.dot_dimension_numbers<[1], [0], [0], [1], [0, 0, 1, 1], [], []>} : vector<16x32xf32>, vector<32x96xf32>, vector<16x96xf32> -> vector<16x96xf32>
    %c0_3 = arith.constant 0 : index
    %c0_4 = arith.constant 0 : index
    %3 = vector.load %arg2[%c0_3, %c0_4] : memref<1x96xf32, #tpu.memory_space<vmem>>, vector<1x96xf32>
    %4 = vector.broadcast %3 : vector<1x96xf32> to vector<16x96xf32>
    %5 = arith.addf %2, %4 : vector<16x96xf32>
    %6 = vector.extract_strided_slice %5 {offsets = [0, 0], sizes = [16, 32], strides = [1, 1]} : vector<16x96xf32> to vector<16x32xf32>
    %7 = vector.extract_strided_slice %5 {offsets = [0, 32], sizes = [16, 32], strides = [1, 1]} : vector<16x96xf32> to vector<16x32xf32>
    %8 = vector.extract_strided_slice %5 {offsets = [0, 64], sizes = [16, 32], strides = [1, 1]} : vector<16x96xf32> to vector<16x32xf32>
    %9 = vector.extract_strided_slice %6 {offsets = [0, 0], sizes = [16, 8], strides = [1, 1]} : vector<16x32xf32> to vector<16x8xf32>
    %10 = vector.extract_strided_slice %6 {offsets = [0, 8], sizes = [16, 8], strides = [1, 1]} : vector<16x32xf32> to vector<16x8xf32>
    %11 = vector.extract_strided_slice %6 {offsets = [0, 16], sizes = [16, 8], strides = [1, 1]} : vector<16x32xf32> to vector<16x8xf32>
    %12 = vector.extract_strided_slice %6 {offsets = [0, 24], sizes = [16, 8], strides = [1, 1]} : vector<16x32xf32> to vector<16x8xf32>
    %13 = tpu.concatenate %9, %10, %11, %12 in 0 : vector<16x8xf32>, vector<16x8xf32>, vector<16x8xf32>, vector<16x8xf32> -> vector<64x8xf32>
    %14 = vector.extract_strided_slice %7 {offsets = [0, 0], sizes = [16, 8], strides = [1, 1]} : vector<16x32xf32> to vector<16x8xf32>
    %15 = vector.extract_strided_slice %7 {offsets = [0, 8], sizes = [16, 8], strides = [1, 1]} : vector<16x32xf32> to vector<16x8xf32>
    %16 = vector.extract_strided_slice %7 {offsets = [0, 16], sizes = [16, 8], strides = [1, 1]} : vector<16x32xf32> to vector<16x8xf32>
    %17 = vector.extract_strided_slice %7 {offsets = [0, 24], sizes = [16, 8], strides = [1, 1]} : vector<16x32xf32> to vector<16x8xf32>
    %18 = tpu.concatenate %14, %15, %16, %17 in 0 : vector<16x8xf32>, vector<16x8xf32>, vector<16x8xf32>, vector<16x8xf32> -> vector<64x8xf32>
    %cst_5 = arith.constant dense<0.000000e+00> : vector<64x64xf32>
    %19 = tpu.matmul %13, %18, %cst_5 {dimension_numbers = #tpu.dot_dimension_numbers<[1], [1], [0], [0], [0, 0, 1, 0], [], []>} : vector<64x8xf32>, vector<64x8xf32>, vector<64x64xf32> -> vector<64x64xf32>
    %c0_6 = arith.constant 0 : index
    %c0_7 = arith.constant 0 : index
    %20 = vector.load %arg3[%c0_6, %c0_7] : memref<64x64xf32, #tpu.memory_space<vmem>>, vector<64x64xf32>
    %21 = arith.addf %19, %20 : vector<64x64xf32>
    %cst_8 = arith.constant dense<0xFF800000> : vector<64xf32>
    %22 = vector.multi_reduction <maximumf>, %21, %cst_8 [0] : vector<64x64xf32> to vector<64xf32>
    %23 = vector.shape_cast %22 : vector<64xf32> to vector<1x64xf32>
    %24 = vector.broadcast %23 : vector<1x64xf32> to vector<64x64xf32>
    %25 = arith.subf %21, %24 : vector<64x64xf32>
    %26 = math.exp %25 : vector<64x64xf32>
    %cst_9 = arith.constant dense<0.000000e+00> : vector<64xf32>
    %27 = vector.multi_reduction <add>, %26, %cst_9 [0] : vector<64x64xf32> to vector<64xf32>
    %28 = vector.shape_cast %27 : vector<64xf32> to vector<1x64xf32>
    %cst_10 = arith.constant 1.000000e+00 : f32
    %29 = vector.broadcast %cst_10 : f32 to vector<1x64xf32>
    %30 = arith.divf %29, %28 : vector<1x64xf32>
    %31 = vector.broadcast %30 : vector<1x64xf32> to vector<64x64xf32>
    %32 = arith.mulf %26, %31 : vector<64x64xf32>
    %cst_11 = arith.constant dense<0.000000e+00> : vector<64xf32>
    %33 = vector.multi_reduction <add>, %32, %cst_11 [1] : vector<64x64xf32> to vector<64xf32>
    %34 = vector.shape_cast %33 : vector<64xf32> to vector<64x1xf32>
    %c0_12 = arith.constant 0 : index
    %c0_13 = arith.constant 0 : index
    %35 = vector.load %arg4[%c0_12, %c0_13] : memref<16x64xf32, #tpu.memory_space<vmem>>, vector<16x64xf32>
    %c0_14 = arith.constant 0 : index
    %c0_15 = arith.constant 0 : index
    %36 = vector.load %arg5[%c0_14, %c0_15] : memref<64x32xf32, #tpu.memory_space<vmem>>, vector<64x32xf32>
    %37 = vector.broadcast %34 : vector<64x1xf32> to vector<64x32xf32>
    %38 = arith.mulf %37, %36 : vector<64x32xf32>
    %cst_16 = arith.constant dense<0.000000e+00> : vector<16x32xf32>
    %39 = tpu.matmul %35, %38, %cst_16 {dimension_numbers = #tpu.dot_dimension_numbers<[1], [0], [0], [1], [0, 0, 1, 1], [], []>} : vector<16x64xf32>, vector<64x32xf32>, vector<16x32xf32> -> vector<16x32xf32>
    %40 = arith.mulf %39, %8 : vector<16x32xf32>
    %c0_17 = arith.constant 0 : index
    %c0_18 = arith.constant 0 : index
    %41 = vector.load %arg9[%c0_17, %c0_18] : memref<32x32xf32, #tpu.memory_space<vmem>>, vector<32x32xf32>
    %cst_19 = arith.constant dense<0.000000e+00> : vector<16x32xf32>
    %42 = tpu.matmul %40, %41, %cst_19 {dimension_numbers = #tpu.dot_dimension_numbers<[1], [0], [0], [1], [0, 0, 1, 1], [], []>} : vector<16x32xf32>, vector<32x32xf32>, vector<16x32xf32> -> vector<16x32xf32>
    %c0_20 = arith.constant 0 : index
    %c0_21 = arith.constant 0 : index
    %43 = vector.load %arg10[%c0_20, %c0_21] : memref<1x32xf32, #tpu.memory_space<vmem>>, vector<1x32xf32>
    %44 = vector.broadcast %43 : vector<1x32xf32> to vector<16x32xf32>
    %45 = arith.addf %42, %44 : vector<16x32xf32>
    %46 = arith.addf %45, %0 : vector<16x32xf32>
    %cst_22 = arith.constant dense<0.000000e+00> : vector<16xf32>
    %47 = vector.multi_reduction <add>, %46, %cst_22 [1] : vector<16x32xf32> to vector<16xf32>
    %48 = vector.shape_cast %47 : vector<16xf32> to vector<16x1xf32>
    %cst_23 = arith.constant 3.200000e+01 : f32
    %49 = vector.broadcast %cst_23 : f32 to vector<16x1xf32>
    %50 = arith.divf %48, %49 : vector<16x1xf32>
    %51 = vector.broadcast %50 : vector<16x1xf32> to vector<16x32xf32>
    %52 = arith.subf %46, %51 : vector<16x32xf32>
    %53 = arith.mulf %52, %52 : vector<16x32xf32>
    %cst_24 = arith.constant dense<0.000000e+00> : vector<16xf32>
    %54 = vector.multi_reduction <add>, %53, %cst_24 [1] : vector<16x32xf32> to vector<16xf32>
    %55 = vector.shape_cast %54 : vector<16xf32> to vector<16x1xf32>
    %cst_25 = arith.constant 3.200000e+01 : f32
    %56 = vector.broadcast %cst_25 : f32 to vector<16x1xf32>
    %57 = arith.divf %55, %56 : vector<16x1xf32>
    %58 = vector.broadcast %50 : vector<16x1xf32> to vector<16x32xf32>
    %59 = arith.subf %46, %58 : vector<16x32xf32>
    %cst_26 = arith.constant 9.99999974E-6 : f32
    %60 = vector.broadcast %cst_26 : f32 to vector<16x1xf32>
    %61 = arith.addf %57, %60 : vector<16x1xf32>
    %62 = math.rsqrt %61 : vector<16x1xf32>
    %63 = vector.broadcast %62 : vector<16x1xf32> to vector<16x32xf32>
    %64 = arith.mulf %59, %63 : vector<16x32xf32>
    %c0_27 = arith.constant 0 : index
    %c0_28 = arith.constant 0 : index
    %65 = vector.load %arg11[%c0_27, %c0_28] : memref<1x32xf32, #tpu.memory_space<vmem>>, vector<1x32xf32>
    %66 = vector.broadcast %65 : vector<1x32xf32> to vector<16x32xf32>
    %67 = arith.mulf %64, %66 : vector<16x32xf32>
    %c0_29 = arith.constant 0 : index
    %c0_30 = arith.constant 0 : index
    %68 = vector.load %arg12[%c0_29, %c0_30] : memref<1x32xf32, #tpu.memory_space<vmem>>, vector<1x32xf32>
    %69 = vector.broadcast %68 : vector<1x32xf32> to vector<16x32xf32>
    %70 = arith.addf %67, %69 : vector<16x32xf32>
    %c0_31 = arith.constant 0 : index
    %c0_32 = arith.constant 0 : index
    %71 = vector.load %arg13[%c0_31, %c0_32] : memref<32x32xf32, #tpu.memory_space<vmem>>, vector<32x32xf32>
    %cst_33 = arith.constant dense<0.000000e+00> : vector<16x32xf32>
    %72 = tpu.matmul %70, %71, %cst_33 {dimension_numbers = #tpu.dot_dimension_numbers<[1], [0], [0], [1], [0, 0, 1, 1], [], []>} : vector<16x32xf32>, vector<32x32xf32>, vector<16x32xf32> -> vector<16x32xf32>
    %c0_34 = arith.constant 0 : index
    %c0_35 = arith.constant 0 : index
    %73 = vector.load %arg14[%c0_34, %c0_35] : memref<1x32xf32, #tpu.memory_space<vmem>>, vector<1x32xf32>
    %74 = vector.broadcast %73 : vector<1x32xf32> to vector<16x32xf32>
    %75 = arith.addf %72, %74 : vector<16x32xf32>
    %76 = arith.addf %75, %70 : vector<16x32xf32>
    %c0_36 = arith.constant 0 : index
    %c0_37 = arith.constant 0 : index
    %77 = vector.load %arg6[%c0_36, %c0_37] : memref<32x128xf32, #tpu.memory_space<vmem>>, vector<32x128xf32>
    %cst_38 = arith.constant dense<0.000000e+00> : vector<16x128xf32>
    %78 = tpu.matmul %76, %77, %cst_38 {dimension_numbers = #tpu.dot_dimension_numbers<[1], [0], [0], [1], [0, 0, 1, 1], [], []>} : vector<16x32xf32>, vector<32x128xf32>, vector<16x128xf32> -> vector<16x128xf32>
    %c0_39 = arith.constant 0 : index
    %c0_40 = arith.constant 0 : index
    %79 = vector.load %arg7[%c0_39, %c0_40] : memref<16x128xf32, #tpu.memory_space<vmem>>, vector<16x128xf32>
    %80 = arith.mulf %78, %79 : vector<16x128xf32>
    %c0_41 = arith.constant 0 : index
    %c0_42 = arith.constant 0 : index
    %81 = vector.load %arg8[%c0_41, %c0_42] : memref<4x16xf32, #tpu.memory_space<vmem>>, vector<4x16xf32>
    %cst_43 = arith.constant dense<0.000000e+00> : vector<4x128xf32>
    %82 = tpu.matmul %81, %80, %cst_43 {dimension_numbers = #tpu.dot_dimension_numbers<[1], [0], [0], [1], [0, 0, 1, 1], [], []>} : vector<4x16xf32>, vector<16x128xf32>, vector<4x128xf32> -> vector<4x128xf32>
    %c0_44 = arith.constant 0 : index
    %c0_45 = arith.constant 0 : index
    %83 = vector.load %arg15[%c0_44, %c0_45] : memref<4x128xf32, #tpu.memory_space<vmem>>, vector<4x128xf32>
    tpu.vector_store %arg15[%c0_44, %c0_45], %82 {strides = array<i32>} : memref<4x128xf32, #tpu.memory_space<vmem>>, vector<4x128xf32>,
    return
  }
}

</mosaic_0001>

<llo_original>
// kernel: encoder_block_pallas.1
$region0: #{encoder_block_pallas.1}
  #allocation0 [shape = 'u32[]', space=smem, size = 0x4, offset = 0x4, fixed_abs, tag = 'smem constant byte address 0x4 - core index']
  #allocation1 [shape = 'u32[144,128]{1,0:T(1,128)}', space=vmem, size = 0x12000, scoped, tag = 'internal scratch']
  %s0 = inlined_call_operand.hbm [shape: f32[16,32], index: 0, kind: input, shape index: {}]
  %s1 = inlined_call_operand.vmem [shape: f32[32,96], index: 1, kind: input, shape index: {}]
  %s2 = inlined_call_operand.vmem [shape: f32[1,96], index: 2, kind: input, shape index: {}]
  %s3 = inlined_call_operand.vmem [shape: f32[64,64], index: 3, kind: input, shape index: {}]
  %s4 = inlined_call_operand.hbm [shape: f32[16,64], index: 4, kind: input, shape index: {}]
  %s5 = inlined_call_operand.vmem [shape: f32[64,32], index: 5, kind: input, shape index: {}]
  %s6 = inlined_call_operand.hbm [shape: f32[32,128], index: 6, kind: input, shape index: {}]
  %s7 = inlined_call_operand.hbm [shape: f32[16,128], index: 7, kind: input, shape index: {}]
  %s8 = inlined_call_operand.vmem [shape: f32[4,16], index: 8, kind: input, shape index: {}]
  %s9 = inlined_call_operand.hbm [shape: f32[32,32], index: 9, kind: input, shape index: {}]
  %s10 = inlined_call_operand.vmem [shape: f32[1,32], index: 10, kind: input, shape index: {}]
  %s11 = inlined_call_operand.vmem [shape: f32[1,32], index: 11, kind: input, shape index: {}]
  %s12 = inlined_call_operand.vmem [shape: f32[1,32], index: 12, kind: input, shape index: {}]
  %s13 = inlined_call_operand.hbm [shape: f32[32,32], index: 13, kind: input, shape index: {}]
  %s14 = inlined_call_operand.vmem [shape: f32[1,32], index: 14, kind: input, shape index: {}]
  %s15 = inlined_call_operand.vmem [shape: f32[4,128], index: 15, kind: output, shape index: {}]
  %s16 = sld [smem:[#allocation0]]
  $region94: #{encoder_block_pallas.1} parent=0
    _
  %s18 = ssub.s32 1, %s16
  %s19 = scalar_select 0, %s18, %s16
  $region1: #{encoder_block_pallas.1} parent=0
    #allocation2 [shape = 'u8[8192]{0}', space=vmem, size = 0x2000, scoped, tag = 'input window, operand 0, single buffered']
    #allocation3 [shape = 's32[1]{0}', space=sflag, size = 0x4, scoped, tag = 'scoped memory for encoder_block_pallas.1']
    #allocation4 [shape = 'u8[8192]{0}', space=vmem, size = 0x2000, scoped, tag = 'input window, operand 4, single buffered']
    #allocation5 [shape = 's32[1]{0}', space=sflag, size = 0x4, scoped, tag = 'scoped memory for encoder_block_pallas.1']
    #allocation6 [shape = 'u8[16384]{0}', space=vmem, size = 0x4000, scoped, tag = 'input window, operand 6, single buffered']
    #allocation7 [shape = 'u8[8192]{0}', space=vmem, size = 0x2000, scoped, tag = 'input window, operand 7, single buffered']
    #allocation8 [shape = 's32[1]{0}', space=sflag, size = 0x4, scoped, tag = 'scoped memory for encoder_block_pallas.1']
    #allocation9 [shape = 'u8[16384]{0}', space=vmem, size = 0x4000, scoped, tag = 'input window, operand 9, single buffered']
    #allocation10 [shape = 'u8[16384]{0}', space=vmem, size = 0x4000, scoped, tag = 'input window, operand 13, single buffered']
    #allocation11 [shape = 's32[1]{0}', space=sflag, size = 0x4, scoped, tag = 'scoped memory for encoder_block_pallas.1']
    %20 = vsyncpa [#allocation3], 0
    %21 = vsyncpa [#allocation5], 0
    %22 = vsyncpa [#allocation8], 0
    %23 = vsyncpa [#allocation11], 0
    // Predicated region
    $region2: #{encoder_block_pallas.1} parent=1 // pred_check
      _
    $region3: #{encoder_block_pallas.1} parent=1 // pred_check_branch
      %25 = sbr.rel (0) target = $region5
    $region4: #{encoder_block_pallas.1} parent=1 // pred_region
      %s27 = ssub.s32 256, 256
      %28 = vsyncadd [#allocation3], %s27
      %s29 = sshll.u32 [#allocation2], 4
      %s30 = int_to_ptr.vmem [resolvable:$true] %s29
      %35 = dma.hbm_to_vmem [thread:$0]  %s0, 256, %s30, [#allocation3], 128, 128, 8
    $region5: #{encoder_block_pallas.1} parent=1 // pred_fallthru
      _
    // Predicated region
    $region6: #{encoder_block_pallas.1} parent=1 // pred_check
      _
    $region7: #{encoder_block_pallas.1} parent=1 // pred_check_branch
      %37 = sbr.rel (0) target = $region9
    $region8: #{encoder_block_pallas.1} parent=1 // pred_region
      _
    $region9: #{encoder_block_pallas.1} parent=1 // pred_fallthru
      _
    // Predicated region
    $region10: #{encoder_block_pallas.1} parent=1 // pred_check
      _
    $region11: #{encoder_block_pallas.1} parent=1 // pred_check_branch
      %39 = sbr.rel (0) target = $region13
    $region12: #{encoder_block_pallas.1} parent=1 // pred_region
      _
    $region13: #{encoder_block_pallas.1} parent=1 // pred_fallthru
      _
    // Predicated region
    $region14: #{encoder_block_pallas.1} parent=1 // pred_check
      _
    $region15: #{encoder_block_pallas.1} parent=1 // pred_check_branch
      %41 = sbr.rel (0) target = $region17
    $region16: #{encoder_block_pallas.1} parent=1 // pred_region
      _
    $region17: #{encoder_block_pallas.1} parent=1 // pred_fallthru
      _
    // Predicated region
    $region18: #{encoder_block_pallas.1} parent=1 // pred_check
      _
    $region19: #{encoder_block_pallas.1} parent=1 // pred_check_branch
      %43 = sbr.rel (0) target = $region21
    $region20: #{encoder_block_pallas.1} parent=1 // pred_region
      %s45 = ssub.s32 256, 256
      %46 = vsyncadd [#allocation5], %s45
      %s47 = sshll.u32 [#allocation4], 4
      %s48 = int_to_ptr.vmem [resolvable:$true] %s47
      %53 = dma.hbm_to_vmem [thread:$0]  %s4, 256, %s48, [#allocation5], 128, 128, 8
    $region21: #{encoder_block_pallas.1} parent=1 // pred_fallthru
      _
    // Predicated region
    $region22: #{encoder_block_pallas.1} parent=1 // pred_check
      _
    $region23: #{encoder_block_pallas.1} parent=1 // pred_check_branch
      %55 = sbr.rel (0) target = $region25
    $region24: #{encoder_block_pallas.1} parent=1 // pred_region
      _
    $region25: #{encoder_block_pallas.1} parent=1 // pred_fallthru
      _
    // Predicated region
    $region26: #{encoder_block_pallas.1} parent=1 // pred_check
      _
    $region27: #{encoder_block_pallas.1} parent=1 // pred_check_branch
      %57 = sbr.rel (0) target = $region29
    $region28: #{encoder_block_pallas.1} parent=1 // pred_region
      %s59 = ssub.s32 512, 512
      %60 = vsyncadd [#allocation5], %s59
      %s61 = sshll.u32 [#allocation6], 4
      %s62 = int_to_ptr.vmem [resolvable:$true] %s61
      %67 = dma.hbm_to_vmem [thread:$0]  %s6, 512, %s62, [#allocation5], 128, 128, 8
    $region29: #{encoder_block_pallas.1} parent=1 // pred_fallthru
      _
    // Predicated region
    $region30: #{encoder_block_pallas.1} parent=1 // pred_check
      _
    $region31: #{encoder_block_pallas.1} parent=1 // pred_check_branch
      %69 = sbr.rel (0) target = $region33
    $region32: #{encoder_block_pallas.1} parent=1 // pred_region
      %s71 = ssub.s32 256, 256
      %72 = vsyncadd [#allocation8], %s71
      %s73 = sshll.u32 [#allocation7], 4
      %s74 = int_to_ptr.vmem [resolvable:$true] %s73
      %79 = dma.hbm_to_vmem [thread:$0]  %s7, 256, %s74, [#allocation8], 128, 128, 8
    $region33: #{encoder_block_pallas.1} parent=1 // pred_fallthru
      _
    // Predicated region
    $region34: #{encoder_block_pallas.1} parent=1 // pred_check
      _
    $region35: #{encoder_block_pallas.1} parent=1 // pred_check_branch
      %81 = sbr.rel (0) target = $region37
    $region36: #{encoder_block_pallas.1} parent=1 // pred_region
      _
    $region37: #{encoder_block_pallas.1} parent=1 // pred_fallthru
      _
    // Predicated region
    $region38: #{encoder_block_pallas.1} parent=1 // pred_check
      _
    $region39: #{encoder_block_pallas.1} parent=1 // pred_check_branch
      %83 = sbr.rel (0) target = $region41
    $region40: #{encoder_block_pallas.1} parent=1 // pred_region
      %s85 = ssub.s32 512, 512
      %86 = vsyncadd [#allocation8], %s85
      %s87 = sshll.u32 [#allocation9], 4
      %s88 = int_to_ptr.vmem [resolvable:$true] %s87
      %93 = dma.hbm_to_vmem [thread:$0]  %s9, 512, %s88, [#allocation8], 128, 128, 8
    $region41: #{encoder_block_pallas.1} parent=1 // pred_fallthru
      _
    // Predicated region
    $region42: #{encoder_block_pallas.1} parent=1 // pred_check
      _
    $region43: #{encoder_block_pallas.1} parent=1 // pred_check_branch
      %95 = sbr.rel (0) target = $region45
    $region44: #{encoder_block_pallas.1} parent=1 // pred_region
      _
    $region45: #{encoder_block_pallas.1} parent=1 // pred_fallthru
      _
    // Predicated region
    $region46: #{encoder_block_pallas.1} parent=1 // pred_check
      _
    $region47: #{encoder_block_pallas.1} parent=1 // pred_check_branch
      %97 = sbr.rel (0) target = $region49
    $region48: #{encoder_block_pallas.1} parent=1 // pred_region
      _
    $region49: #{encoder_block_pallas.1} parent=1 // pred_fallthru
      _
    // Predicated region
    $region50: #{encoder_block_pallas.1} parent=1 // pred_check
      _
    $region51: #{encoder_block_pallas.1} parent=1 // pred_check_branch
      %99 = sbr.rel (0) target = $region53
    $region52: #{encoder_block_pallas.1} parent=1 // pred_region
      _
    $region53: #{encoder_block_pallas.1} parent=1 // pred_fallthru
      _
    // Predicated region
    $region54: #{encoder_block_pallas.1} parent=1 // pred_check
      _
    $region55: #{encoder_block_pallas.1} parent=1 // pred_check_branch
      %101 = sbr.rel (0) target = $region57
    $region56: #{encoder_block_pallas.1} parent=1 // pred_region
      %s103 = ssub.s32 512, 512
      %104 = vsyncadd [#allocation11], %s103
      %s105 = sshll.u32 [#allocation10], 4
      %s106 = int_to_ptr.vmem [resolvable:$true] %s105
      %111 = dma.hbm_to_vmem [thread:$0]  %s13, 512, %s106, [#allocation11], 128, 128, 8
    $region57: #{encoder_block_pallas.1} parent=1 // pred_fallthru
      _
    // Predicated region
    $region58: #{encoder_block_pallas.1} parent=1 // pred_check
      _
    $region59: #{encoder_block_pallas.1} parent=1 // pred_check_branch
      %113 = sbr.rel (0) target = $region61
    $region60: #{encoder_block_pallas.1} parent=1 // pred_region
      _
    $region61: #{encoder_block_pallas.1} parent=1 // pred_fallthru
      _
    // Predicated region
    $region62: #{encoder_block_pallas.1} parent=1 // pred_check
      _
    $region63: #{encoder_block_pallas.1} parent=1 // pred_check_branch
      %115 = sbr.rel (0) target = $region65
    $region64: #{encoder_block_pallas.1} parent=1 // pred_region
      %116 = dma.done [#allocation3], 256
    $region65: #{encoder_block_pallas.1} parent=1 // pred_fallthru
      _
    // Predicated region
    $region66: #{encoder_block_pallas.1} parent=1 // pred_check
      _
    $region67: #{encoder_block_pallas.1} parent=1 // pred_check_branch
      %118 = sbr.rel (0) target = $region69
    $region68: #{encoder_block_pallas.1} parent=1 // pred_region
      %119 = dma.done [#allocation5], 256
    $region69: #{encoder_block_pallas.1} parent=1 // pred_fallthru
      _
    // Predicated region
    $region70: #{encoder_block_pallas.1} parent=1 // pred_check
      _
    $region71: #{encoder_block_pallas.1} parent=1 // pred_check_branch
      %121 = sbr.rel (0) target = $region73
    $region72: #{encoder_block_pallas.1} parent=1 // pred_region
      %122 = dma.done [#allocation5], 512
    $region73: #{encoder_block_pallas.1} parent=1 // pred_fallthru
      _
    // Predicated region
    $region74: #{encoder_block_pallas.1} parent=1 // pred_check
      _
    $region75: #{encoder_block_pallas.1} parent=1 // pred_check_branch
      %124 = sbr.rel (0) target = $region77
    $region76: #{encoder_block_pallas.1} parent=1 // pred_region
      %125 = dma.done [#allocation8], 256
    $region77: #{encoder_block_pallas.1} parent=1 // pred_fallthru
      _
    // Predicated region
    $region78: #{encoder_block_pallas.1} parent=1 // pred_check
      _
    $region79: #{encoder_block_pallas.1} parent=1 // pred_check_branch
      %127 = sbr.rel (0) target = $region81
    $region80: #{encoder_block_pallas.1} parent=1 // pred_region
      %128 = dma.done [#allocation8], 512
    $region81: #{encoder_block_pallas.1} parent=1 // pred_fallthru
      _
    // Predicated region
    $region82: #{encoder_block_pallas.1} parent=1 // pred_check
      _
    $region83: #{encoder_block_pallas.1} parent=1 // pred_check_branch
      %130 = sbr.rel (0) target = $region85
    $region84: #{encoder_block_pallas.1} parent=1 // pred_region
      %131 = dma.done [#allocation11], 512
    $region85: #{encoder_block_pallas.1} parent=1 // pred_fallthru
      _
    %v132 = vld [vmem:[#allocation2] sm:$0xff]
    %v133 = vld [vmem:[#allocation2 + $0x8] sm:$0xff]
    %v134 = vld [vmem:[%s1] sm:$0xff]
    %v135 = vld [vmem:[%s1 + $0x8] sm:$0xff]
    %v136 = vld [vmem:[%s1 + $0x10] sm:$0xff]
    %v137 = vld [vmem:[%s1 + $0x18] sm:$0xff]
    %v138 = vld [vmem:[%s2] sm:$0x1]
    %v140 = vlaneseq
    %v141 = vshrl.u32 %v140, 7
    %v142 = vsub.s32 0, %v141
    %v143 = vrot.slane %v138, %v142
    %vm145 = vcmask 261120
    %v147 = vsel %vm145, %v132, 0
    %v150 = vsel %vm145, %v133, 0
    %152 = vmatprep.subr.mxu0 0.0
    %153 = vmatpush1.msra.mxu0 %v134
    %154 = vmatprep.subr.mxu0 0.0
    %155 = vmatpush1.msra.mxu0 %v135
    %156 = vmatprep.subr.mxu0 0.0
    %157 = vmatpush1.msra.mxu0 %v136
    %158 = vmatprep.subr.mxu0 0.0
    %159 = vmatpush1.msra.mxu0 %v137
    %160 = vmatprep.subr.mxu0 0.0
    %161 = vmatpush1.msra.mxu0 0.0
    %162 = vmatprep.subr.mxu0 0.0
    %163 = vmatpush1.msra.mxu0 0.0
    %164 = vmatprep.subr.mxu0 0.0
    %165 = vmatpush1.msra.mxu0 0.0
    %166 = vmatprep.subr.mxu0 0.0
    %167 = vmatpush1.msra.mxu0 0.0
    %168 = vmatprep.subr.mxu0 0.0
    %169 = vmatpush1.msra.mxu0 0.0
    %170 = vmatprep.subr.mxu0 0.0
    %171 = vmatpush1.msra.mxu0 0.0
    %172 = vmatprep.subr.mxu0 0.0
    %173 = vmatpush1.msra.mxu0 0.0
    %174 = vmatprep.subr.mxu0 0.0
    %175 = vmatpush1.msra.mxu0 0.0
    %176 = vmatprep.subr.mxu0 0.0
    %177 = vmatpush1.msra.mxu0 0.0
    %178 = vmatprep.subr.mxu0 0.0
    %179 = vmatpush1.msra.mxu0 0.0
    %180 = vmatprep.subr.mxu0 0.0
    %181 = vmatpush1.msra.mxu0 0.0
    %182 = vmatprep.subr.mxu0 0.0
    %183 = vmatpush1.msra.mxu0 0.0
    %184 = vmatprep.subr.mxu0 0.0
    %185 = vmatpush1.msra.mxu0 0.0
    %186 = vmatprep.subr.mxu0 0.0
    %187 = vmatpush1.msra.mxu0 0.0
    %188 = vmatprep.subr.mxu0 0.0
    %189 = vmatpush1.msra.mxu0 0.0
    %190 = vmatprep.subr.mxu0 0.0
    %191 = vmatpush1.msra.mxu0 0.0
    %192 = vmatprep.subr.mxu0 0.0
    %193 = vmatpush1.msra.mxu0 0.0
    %194 = vmatprep.subr.mxu0 0.0
    %195 = vmatpush1.msra.mxu0 0.0
    %196 = vmatprep.subr.mxu0 0.0
    %197 = vmatpush1.msra.mxu0 0.0
    %198 = vmatprep.subr.mxu0 0.0
    %199 = vmatpush1.msra.mxu0 0.0
    %200 = vmatprep.subr.mxu0 0.0
    %201 = vmatpush1.msra.mxu0 0.0
    %202 = vmatprep.subr.mxu0 0.0
    %203 = vmatpush1.msra.mxu0 0.0
    %204 = vmatprep.subr.mxu0 0.0
    %205 = vmatpush1.msra.mxu0 0.0
    %206 = vmatprep.subr.mxu0 0.0
    %207 = vmatpush1.msra.mxu0 0.0
    %208 = vmatprep.subr.mxu0 0.0
    %209 = vmatpush1.msra.mxu0 0.0
    %210 = vmatprep.subr.mxu0 0.0
    %211 = vmatpush1.msra.mxu0 0.0
    %212 = vmatprep.subr.mxu0 0.0
    %213 = vmatpush1.msra.mxu0 0.0
    %214 = vmatprep.subr.mxu0 0.0
    %215 = vmatpush1.msra.mxu0 0.0
    %216 = vmatprep.mubr.f32.mxu0 0.0
    %217 = vmatmul.mubr.f32.gmra.mrb[0].mxu0 %v147
    %v218 = vpop.f32.mrb[0].mxu0
    %v219 = vadd.f32 %v143, %v218
    %v220 = vpop.f32.mrb[0].mxu0
    %221 = vmatprep.mubr.f32.mxu0 0.0
    %222 = vmatmul.mubr.f32.gmra.mrb[0].mxu0 %v150
    %v223 = vpop.f32.mrb[0].mxu0
    %v224 = vadd.f32 %v143, %v223
    %v225 = vpop.f32.mrb[0].mxu0
    %226 = vdwg.mxu0
    %229 = vrot.lane.b32.xlu0 %v219, 120
    %v230 = vpop.permute.xlu0 %229
    %231 = vrot.lane.b32.xlu0 %v224, 120
    %v232 = vpop.permute.xlu0 %231
    %233 = vrot.lane.b32.xlu0 %v219, 112
    %v234 = vpop.permute.xlu0 %233
    %235 = vrot.lane.b32.xlu0 %v224, 112
    %v236 = vpop.permute.xlu0 %235
    %237 = vrot.lane.b32.xlu0 %v219, 104
    %v238 = vpop.permute.xlu0 %237
    %239 = vrot.lane.b32.xlu0 %v224, 104
    %v240 = vpop.permute.xlu0 %239
    %v241 = vld [vmem:[%s3] sm:$0xff]
    %v242 = vld [vmem:[%s3 + $0x8] sm:$0xff]
    %v243 = vld [vmem:[%s3 + $0x10] sm:$0xff]
    %v244 = vld [vmem:[%s3 + $0x18] sm:$0xff]
    %v245 = vld [vmem:[%s3 + $0x20] sm:$0xff]
    %v246 = vld [vmem:[%s3 + $0x28] sm:$0xff]
    %v247 = vld [vmem:[%s3 + $0x30] sm:$0xff]
    %v248 = vld [vmem:[%s3 + $0x38] sm:$0xff]
    %249 = vrot.lane.b32.xlu0 %v219, 96
    %v250 = vpop.permute.xlu0 %249
    %251 = vrot.lane.b32.xlu0 %v224, 96
    %v252 = vpop.permute.xlu0 %251
    %253 = vrot.lane.b32.xlu0 %v230, 96
    %v254 = vpop.permute.xlu0 %253
    %255 = vrot.lane.b32.xlu0 %v232, 96
    %v256 = vpop.permute.xlu0 %255
    %257 = vrot.lane.b32.xlu0 %v234, 96
    %v258 = vpop.permute.xlu0 %257
    %259 = vrot.lane.b32.xlu0 %v236, 96
    %v260 = vpop.permute.xlu0 %259
    %261 = vrot.lane.b32.xlu0 %v238, 96
    %v262 = vpop.permute.xlu0 %261
    %263 = vrot.lane.b32.xlu0 %v240, 96
    %v264 = vpop.permute.xlu0 %263
    %vm265 = vcmask 64512
    %v266 = vsel %vm265, %v219, 0
    %v268 = vsel %vm265, %v224, 0
    %v270 = vsel %vm265, %v230, 0
    %v272 = vsel %vm265, %v232, 0
    %v274 = vsel %vm265, %v234, 0
    %v276 = vsel %vm265, %v236, 0
    %v278 = vsel %vm265, %v238, 0
    %v280 = vsel %vm265, %v240, 0
    %v282 = vsel %vm265, %v250, 0
    %v284 = vsel %vm265, %v252, 0
    %v286 = vsel %vm265, %v254, 0
    %v288 = vsel %vm265, %v256, 0
    %v290 = vsel %vm265, %v258, 0
    %v292 = vsel %vm265, %v260, 0
    %v294 = vsel %vm265, %v262, 0
    %v296 = vsel %vm265, %v264, 0
    %298 = vmatprep.subr.mxu0 0.0
    %299 = vmatpush1.xpose.msra.mxu0 %v282
    %300 = vmatprep.subr.mxu0 0.0
    %301 = vmatpush1.xpose.msra.mxu0 %v284
    %302 = vmatprep.subr.mxu0 0.0
    %303 = vmatpush1.xpose.msra.mxu0 %v286
    %304 = vmatprep.subr.mxu0 0.0
    %305 = vmatpush1.xpose.msra.mxu0 %v288
    %306 = vmatprep.subr.mxu0 0.0
    %307 = vmatpush1.xpose.msra.mxu0 %v290
    %308 = vmatprep.subr.mxu0 0.0
    %309 = vmatpush1.xpose.msra.mxu0 %v292
    %310 = vmatprep.subr.mxu0 0.0
    %311 = vmatpush1.xpose.msra.mxu0 %v294
    %312 = vmatprep.subr.mxu0 0.0
    %313 = vmatpush1.xpose.msra.mxu0 %v296
    %314 = vmatprep.subr.mxu0 0.0
    %315 = vmatpush1.xpose.msra.mxu0 0.0
    %316 = vmatprep.subr.mxu0 0.0
    %317 = vmatpush1.xpose.msra.mxu0 0.0
    %318 = vmatprep.subr.mxu0 0.0
    %319 = vmatpush1.xpose.msra.mxu0 0.0
    %320 = vmatprep.subr.mxu0 0.0
    %321 = vmatpush1.xpose.msra.mxu0 0.0
    %322 = vmatprep.subr.mxu0 0.0
    %323 = vmatpush1.xpose.msra.mxu0 0.0
    %324 = vmatprep.subr.mxu0 0.0
    %325 = vmatpush1.xpose.msra.mxu0 0.0
    %326 = vmatprep.subr.mxu0 0.0
    %327 = vmatpush1.xpose.msra.mxu0 0.0
    %328 = vmatprep.subr.mxu0 0.0
    %329 = vmatpush1.xpose.msra.mxu0 0.0
    %330 = vmatprep.subr.mxu0 0.0
    %331 = vmatpush1.xpose.msra.mxu0 0.0
    %332 = vmatprep.subr.mxu0 0.0
    %333 = vmatpush1.xpose.msra.mxu0 0.0
    %334 = vmatprep.subr.mxu0 0.0
    %335 = vmatpush1.xpose.msra.mxu0 0.0
    %336 = vmatprep.subr.mxu0 0.0
    %337 = vmatpush1.xpose.msra.mxu0 0.0
    %338 = vmatprep.subr.mxu0 0.0
    %339 = vmatpush1.xpose.msra.mxu0 0.0
    %340 = vmatprep.subr.mxu0 0.0
    %341 = vmatpush1.xpose.msra.mxu0 0.0
    %342 = vmatprep.subr.mxu0 0.0
    %343 = vmatpush1.xpose.msra.mxu0 0.0
    %344 = vmatprep.subr.mxu0 0.0
    %345 = vmatpush1.xpose.msra.mxu0 0.0
    %346 = vmatprep.subr.mxu0 0.0
    %347 = vmatpush1.xpose.msra.mxu0 0.0
    %348 = vmatprep.subr.mxu0 0.0
    %349 = vmatpush1.xpose.msra.mxu0 0.0
    %350 = vmatprep.subr.mxu0 0.0
    %351 = vmatpush1.xpose.msra.mxu0 0.0
    %352 = vmatprep.subr.mxu0 0.0
    %353 = vmatpush1.xpose.msra.mxu0 0.0
    %354 = vmatprep.subr.mxu0 0.0
    %355 = vmatpush1.xpose.msra.mxu0 0.0
    %356 = vmatprep.subr.mxu0 0.0
    %357 = vmatpush1.xpose.msra.mxu0 0.0
    %358 = vmatprep.subr.mxu0 0.0
    %359 = vmatpush1.xpose.msra.mxu0 0.0
    %360 = vmatprep.subr.mxu0 0.0
    %361 = vmatpush1.xpose.msra.mxu0 0.0
    %362 = vmatprep.mubr.f32.mxu0 0.0
    %363 = vmatmul.mubr.f32.gmra.mrb[0].mxu0 %v266
    %v364 = vpop.f32.mrb[0].mxu0
    %v365 = vadd.f32 %v241, %v364
    %v366 = vpop.f32.mrb[0].mxu0
    %367 = vmatprep.mubr.f32.mxu0 0.0
    %368 = vmatmul.mubr.f32.gmra.mrb[0].mxu0 %v268
    %v369 = vpop.f32.mrb[0].mxu0
    %v370 = vadd.f32 %v242, %v369
    %v371 = vpop.f32.mrb[0].mxu0
    %372 = vmatprep.mubr.f32.mxu0 0.0
    %373 = vmatmul.mubr.f32.gmra.mrb[0].mxu0 %v270
    %v374 = vpop.f32.mrb[0].mxu0
    %v375 = vadd.f32 %v243, %v374
    %v376 = vpop.f32.mrb[0].mxu0
    %377 = vmatprep.mubr.f32.mxu0 0.0
    %378 = vmatmul.mubr.f32.gmra.mrb[0].mxu0 %v272
    %v379 = vpop.f32.mrb[0].mxu0
    %v380 = vadd.f32 %v244, %v379
    %v381 = vpop.f32.mrb[0].mxu0
    %382 = vmatprep.mubr.f32.mxu0 0.0
    %383 = vmatmul.mubr.f32.gmra.mrb[0].mxu0 %v274
    %v384 = vpop.f32.mrb[0].mxu0
    %v385 = vadd.f32 %v245, %v384
    %v386 = vpop.f32.mrb[0].mxu0
    %387 = vmatprep.mubr.f32.mxu0 0.0
    %388 = vmatmul.mubr.f32.gmra.mrb[0].mxu0 %v276
    %v389 = vpop.f32.mrb[0].mxu0
    %v390 = vadd.f32 %v246, %v389
    %v391 = vpop.f32.mrb[0].mxu0
    %392 = vmatprep.mubr.f32.mxu0 0.0
    %393 = vmatmul.mubr.f32.gmra.mrb[0].mxu0 %v278
    %v394 = vpop.f32.mrb[0].mxu0
    %v395 = vadd.f32 %v247, %v394
    %v396 = vpop.f32.mrb[0].mxu0
    %397 = vmatprep.mubr.f32.mxu0 0.0
    %398 = vmatmul.mubr.f32.gmra.mrb[0].mxu0 %v280
    %v399 = vpop.f32.mrb[0].mxu0
    %v400 = vadd.f32 %v248, %v399
    %v401 = vpop.f32.mrb[0].mxu0
    %402 = vdwg.mxu0
    %vm403 = vcmask 523264
    %v404 = vsel %vm403, %v365, -inf
    %v405 = vsel %vm403, %v370, -inf
    %v406 = vsel %vm403, %v375, -inf
    %v407 = vsel %vm403, %v380, -inf
    %v408 = vsel %vm403, %v385, -inf
    %v409 = vmax.f32 %v404, %v408
    %v410 = vsel %vm403, %v390, -inf
    %v411 = vmax.f32 %v405, %v410
    %v412 = vsel %vm403, %v395, -inf
    %v413 = vmax.f32 %v406, %v412
    %v414 = vsel %vm403, %v400, -inf
    %v415 = vmax.f32 %v407, %v414
    %v416 = vmax.f32 %v409, %v411
    %v417 = vmax.f32 %v413, %v415
    %v418 = vmax.f32 %v416, %v417
    %v419 = vrot.slane %v418, 4
    %v420 = vmax.f32 %v418, %v419
    %v421 = vrot.slane %v420, 2
    %v422 = vmax.f32 %v420, %v421
    %v423 = vrot.slane %v422, 1
    %v424 = vmax.f32 %v422, %v423
    %v425 = vsub.f32 %v365, %v424
    %v426 = vsub.f32 %v370, %v424
    %v427 = vsub.f32 %v375, %v424
    %v428 = vsub.f32 %v380, %v424
    %v429 = vsub.f32 %v385, %v424
    %v430 = vsub.f32 %v390, %v424
    %v431 = vsub.f32 %v395, %v424
    %v432 = vsub.f32 %v400, %v424
    %v433 = vmul.f32 %v425, 1.442695
    %v434 = vpow.pop %v433
    %v435 = vmul.f32 %v426, 1.442695
    %v436 = vpow.pop %v435
    %v437 = vmul.f32 %v427, 1.442695
    %v438 = vpow.pop %v437
    %v439 = vmul.f32 %v428, 1.442695
    %v440 = vpow.pop %v439
    %v441 = vmul.f32 %v429, 1.442695
    %v442 = vpow.pop %v441
    %v443 = vmul.f32 %v430, 1.442695
    %v444 = vpow.pop %v443
    %v445 = vmul.f32 %v431, 1.442695
    %v446 = vpow.pop %v445
    %v447 = vmul.f32 %v432, 1.442695
    %v448 = vpow.pop %v447
    %v449 = vsel %vm403, %v434, 0.0
    %v450 = vsel %vm403, %v436, 0.0
    %v451 = vadd.f32 %v449, %v450
    %v452 = vsel %vm403, %v438, 0.0
    %v453 = vadd.f32 %v451, %v452
    %v454 = vsel %vm403, %v440, 0.0
    %v455 = vadd.f32 %v453, %v454
    %v456 = vsel %vm403, %v442, 0.0
    %v457 = vadd.f32 %v455, %v456
    %v458 = vsel %vm403, %v444, 0.0
    %v459 = vadd.f32 %v457, %v458
    %v460 = vsel %vm403, %v446, 0.0
    %v461 = vadd.f32 %v459, %v460
    %v462 = vsel %vm403, %v448, 0.0
    %v463 = vadd.f32 %v461, %v462
    %v464 = vrot.slane %v463, 4
    %v465 = vadd.f32 %v463, %v464
    %v466 = vrot.slane %v465, 2
    %v467 = vadd.f32 %v465, %v466
    %v468 = vrot.slane %v467, 1
    %v469 = vadd.f32 %v467, %v468
    %v470 = vrcp.pop %v469
    %v471 = vmul.f32 1.0, %v470
    %v472 = vmul.f32 %v434, %v471
    %v473 = vmul.f32 %v436, %v471
    %v474 = vmul.f32 %v438, %v471
    %v475 = vmul.f32 %v440, %v471
    %v476 = vmul.f32 %v442, %v471
    %v477 = vmul.f32 %v444, %v471
    %v478 = vmul.f32 %v446, %v471
    %v479 = vmul.f32 %v448, %v471
    %v480 = vsel %vm403, %v472, 0.0
    %481 = vadd.xlane.f32.xlu0 %v480
    %v482 = vpop.xlane.xlu0 %481
    %v483 = vsel %vm403, %v473, 0.0
    %484 = vadd.xlane.f32.xlu0 %v483
    %v485 = vpop.xlane.xlu0 %484
    %v486 = vsel %vm403, %v474, 0.0
    %487 = vadd.xlane.f32.xlu0 %v486
    %v488 = vpop.xlane.xlu0 %487
    %v489 = vsel %vm403, %v475, 0.0
    %490 = vadd.xlane.f32.xlu0 %v489
    %v491 = vpop.xlane.xlu0 %490
    %v492 = vsel %vm403, %v476, 0.0
    %493 = vadd.xlane.f32.xlu0 %v492
    %v494 = vpop.xlane.xlu0 %493
    %v495 = vsel %vm403, %v477, 0.0
    %496 = vadd.xlane.f32.xlu0 %v495
    %v497 = vpop.xlane.xlu0 %496
    %v498 = vsel %vm403, %v478, 0.0
    %499 = vadd.xlane.f32.xlu0 %v498
    %v500 = vpop.xlane.xlu0 %499
    %v501 = vsel %vm403, %v479, 0.0
    %502 = vadd.xlane.f32.xlu0 %v501
    %v503 = vpop.xlane.xlu0 %502
    %v504 = vld [vmem:[#allocation4] sm:$0xff]
    %v505 = vld [vmem:[#allocation4 + $0x8] sm:$0xff]
    %v506 = vld [vmem:[%s5] sm:$0xff]
    %v507 = vld [vmem:[%s5 + $0x8] sm:$0xff]
    %v508 = vld [vmem:[%s5 + $0x10] sm:$0xff]
    %v509 = vld [vmem:[%s5 + $0x18] sm:$0xff]
    %v510 = vld [vmem:[%s5 + $0x20] sm:$0xff]
    %v511 = vld [vmem:[%s5 + $0x28] sm:$0xff]
    %v512 = vld [vmem:[%s5 + $0x30] sm:$0xff]
    %v513 = vld [vmem:[%s5 + $0x38] sm:$0xff]
    %v514 = vmul.f32 %v482, %v506
    %v515 = vmul.f32 %v485, %v507
    %v516 = vmul.f32 %v488, %v508
    %v517 = vmul.f32 %v491, %v509
    %v518 = vmul.f32 %v494, %v510
    %v519 = vmul.f32 %v497, %v511
    %v520 = vmul.f32 %v500, %v512
    %v521 = vmul.f32 %v503, %v513
    %v523 = vsel %vm403, %v504, 0
    %v526 = vsel %vm403, %v505, 0
    %528 = vmatprep.subr.mxu0 0.0
    %529 = vmatpush1.msra.mxu0 %v514
    %530 = vmatprep.subr.mxu0 0.0
    %531 = vmatpush1.msra.mxu0 %v515
    %532 = vmatprep.subr.mxu0 0.0
    %533 = vmatpush1.msra.mxu0 %v516
    %534 = vmatprep.subr.mxu0 0.0
    %535 = vmatpush1.msra.mxu0 %v517
    %536 = vmatprep.subr.mxu0 0.0
    %537 = vmatpush1.msra.mxu0 %v518
    %538 = vmatprep.subr.mxu0 0.0
    %539 = vmatpush1.msra.mxu0 %v519
    %540 = vmatprep.subr.mxu0 0.0
    %541 = vmatpush1.msra.mxu0 %v520
    %542 = vmatprep.subr.mxu0 0.0
    %543 = vmatpush1.msra.mxu0 %v521
    %544 = vmatprep.subr.mxu0 0.0
    %545 = vmatpush1.msra.mxu0 0.0
    %546 = vmatprep.subr.mxu0 0.0
    %547 = vmatpush1.msra.mxu0 0.0
    %548 = vmatprep.subr.mxu0 0.0
    %549 = vmatpush1.msra.mxu0 0.0
    %550 = vmatprep.subr.mxu0 0.0
    %551 = vmatpush1.msra.mxu0 0.0
    %552 = vmatprep.subr.mxu0 0.0
    %553 = vmatpush1.msra.mxu0 0.0
    %554 = vmatprep.subr.mxu0 0.0
    %555 = vmatpush1.msra.mxu0 0.0
    %556 = vmatprep.subr.mxu0 0.0
    %557 = vmatpush1.msra.mxu0 0.0
    %558 = vmatprep.subr.mxu0 0.0
    %559 = vmatpush1.msra.mxu0 0.0
    %560 = vmatprep.subr.mxu0 0.0
    %561 = vmatpush1.msra.mxu0 0.0
    %562 = vmatprep.subr.mxu0 0.0
    %563 = vmatpush1.msra.mxu0 0.0
    %564 = vmatprep.subr.mxu0 0.0
    %565 = vmatpush1.msra.mxu0 0.0
    %566 = vmatprep.subr.mxu0 0.0
    %567 = vmatpush1.msra.mxu0 0.0
    %568 = vmatprep.subr.mxu0 0.0
    %569 = vmatpush1.msra.mxu0 0.0
    %570 = vmatprep.subr.mxu0 0.0
    %571 = vmatpush1.msra.mxu0 0.0
    %572 = vmatprep.subr.mxu0 0.0
    %573 = vmatpush1.msra.mxu0 0.0
    %574 = vmatprep.subr.mxu0 0.0
    %575 = vmatpush1.msra.mxu0 0.0
    %576 = vmatprep.subr.mxu0 0.0
    %577 = vmatpush1.msra.mxu0 0.0
    %578 = vmatprep.subr.mxu0 0.0
    %579 = vmatpush1.msra.mxu0 0.0
    %580 = vmatprep.subr.mxu0 0.0
    %581 = vmatpush1.msra.mxu0 0.0
    %582 = vmatprep.subr.mxu0 0.0
    %583 = vmatpush1.msra.mxu0 0.0
    %584 = vmatprep.subr.mxu0 0.0
    %585 = vmatpush1.msra.mxu0 0.0
    %586 = vmatprep.subr.mxu0 0.0
    %587 = vmatpush1.msra.mxu0 0.0
    %588 = vmatprep.subr.mxu0 0.0
    %589 = vmatpush1.msra.mxu0 0.0
    %590 = vmatprep.subr.mxu0 0.0
    %591 = vmatpush1.msra.mxu0 0.0
    %592 = vmatprep.mubr.f32.mxu0 0.0
    %593 = vmatmul.mubr.f32.gmra.mrb[0].mxu0 %v523
    %v594 = vpop.f32.mrb[0].mxu0
    %v595 = vadd.f32 0.0, %v594
    %v596 = vpop.f32.mrb[0].mxu0
    %597 = vmatprep.mubr.f32.mxu0 0.0
    %598 = vmatmul.mubr.f32.gmra.mrb[0].mxu0 %v526
    %v599 = vpop.f32.mrb[0].mxu0
    %v600 = vadd.f32 0.0, %v599
    %v601 = vpop.f32.mrb[0].mxu0
    %602 = vdwg.mxu0
    %603 = vrot.lane.b32.xlu0 %v219, 64
    %v604 = vpop.permute.xlu0 %603
    %605 = vrot.lane.b32.xlu0 %v224, 64
    %v606 = vpop.permute.xlu0 %605
    %v609 = vmul.f32 %v595, %v604
    %v610 = vmul.f32 %v600, %v606
    %v611 = vld [vmem:[#allocation9] sm:$0xff]
    %v612 = vld [vmem:[#allocation9 + $0x8] sm:$0xff]
    %v613 = vld [vmem:[#allocation9 + $0x10] sm:$0xff]
    %v614 = vld [vmem:[#allocation9 + $0x18] sm:$0xff]
    %v615 = vld [vmem:[%s10] sm:$0x1]
    %v617 = vlaneseq
    %v618 = vshrl.u32 %v617, 7
    %v619 = vsub.s32 0, %v618
    %v620 = vrot.slane %v615, %v619
    %v623 = vsel %vm145, %v609, 0
    %v626 = vsel %vm145, %v610, 0
    %628 = vmatprep.subr.mxu0 0.0
    %629 = vmatpush1.msra.mxu0 %v611
    %630 = vmatprep.subr.mxu0 0.0
    %631 = vmatpush1.msra.mxu0 %v612
    %632 = vmatprep.subr.mxu0 0.0
    %633 = vmatpush1.msra.mxu0 %v613
    %634 = vmatprep.subr.mxu0 0.0
    %635 = vmatpush1.msra.mxu0 %v614
    %636 = vmatprep.subr.mxu0 0.0
    %637 = vmatpush1.msra.mxu0 0.0
    %638 = vmatprep.subr.mxu0 0.0
    %639 = vmatpush1.msra.mxu0 0.0
    %640 = vmatprep.subr.mxu0 0.0
    %641 = vmatpush1.msra.mxu0 0.0
    %642 = vmatprep.subr.mxu0 0.0
    %643 = vmatpush1.msra.mxu0 0.0
    %644 = vmatprep.subr.mxu0 0.0
    %645 = vmatpush1.msra.mxu0 0.0
    %646 = vmatprep.subr.mxu0 0.0
    %647 = vmatpush1.msra.mxu0 0.0
    %648 = vmatprep.subr.mxu0 0.0
    %649 = vmatpush1.msra.mxu0 0.0
    %650 = vmatprep.subr.mxu0 0.0
    %651 = vmatpush1.msra.mxu0 0.0
    %652 = vmatprep.subr.mxu0 0.0
    %653 = vmatpush1.msra.mxu0 0.0
    %654 = vmatprep.subr.mxu0 0.0
    %655 = vmatpush1.msra.mxu0 0.0
    %656 = vmatprep.subr.mxu0 0.0
    %657 = vmatpush1.msra.mxu0 0.0
    %658 = vmatprep.subr.mxu0 0.0
    %659 = vmatpush1.msra.mxu0 0.0
    %660 = vmatprep.subr.mxu0 0.0
    %661 = vmatpush1.msra.mxu0 0.0
    %662 = vmatprep.subr.mxu0 0.0
    %663 = vmatpush1.msra.mxu0 0.0
    %664 = vmatprep.subr.mxu0 0.0
    %665 = vmatpush1.msra.mxu0 0.0
    %666 = vmatprep.subr.mxu0 0.0
    %667 = vmatpush1.msra.mxu0 0.0
    %668 = vmatprep.subr.mxu0 0.0
    %669 = vmatpush1.msra.mxu0 0.0
    %670 = vmatprep.subr.mxu0 0.0
    %671 = vmatpush1.msra.mxu0 0.0
    %672 = vmatprep.subr.mxu0 0.0
    %673 = vmatpush1.msra.mxu0 0.0
    %674 = vmatprep.subr.mxu0 0.0
    %675 = vmatpush1.msra.mxu0 0.0
    %676 = vmatprep.subr.mxu0 0.0
    %677 = vmatpush1.msra.mxu0 0.0
    %678 = vmatprep.subr.mxu0 0.0
    %679 = vmatpush1.msra.mxu0 0.0
    %680 = vmatprep.subr.mxu0 0.0
    %681 = vmatpush1.msra.mxu0 0.0
    %682 = vmatprep.subr.mxu0 0.0
    %683 = vmatpush1.msra.mxu0 0.0
    %684 = vmatprep.subr.mxu0 0.0
    %685 = vmatpush1.msra.mxu0 0.0
    %686 = vmatprep.subr.mxu0 0.0
    %687 = vmatpush1.msra.mxu0 0.0
    %688 = vmatprep.subr.mxu0 0.0
    %689 = vmatpush1.msra.mxu0 0.0
    %690 = vmatprep.subr.mxu0 0.0
    %691 = vmatpush1.msra.mxu0 0.0
    %692 = vmatprep.mubr.f32.mxu0 0.0
    %693 = vmatmul.mubr.f32.gmra.mrb[0].mxu0 %v623
    %v694 = vpop.f32.mrb[0].mxu0
    %v695 = vadd.f32 %v620, %v694
    %v696 = vpop.f32.mrb[0].mxu0
    %697 = vmatprep.mubr.f32.mxu0 0.0
    %698 = vmatmul.mubr.f32.gmra.mrb[0].mxu0 %v626
    %v699 = vpop.f32.mrb[0].mxu0
    %v700 = vadd.f32 %v620, %v699
    %v701 = vpop.f32.mrb[0].mxu0
    %702 = vdwg.mxu0
    %v703 = vadd.f32 %v695, %v132
    %v704 = vadd.f32 %v700, %v133
    %v705 = vsel %vm145, %v703, 0.0
    %706 = vadd.xlane.f32.xlu0 %v705
    %v707 = vpop.xlane.xlu0 %706
    %v708 = vsel %vm145, %v704, 0.0
    %709 = vadd.xlane.f32.xlu0 %v708
    %v710 = vpop.xlane.xlu0 %709
    %v711 = vrcp.pop 32.0
    %v712 = vmul.f32 %v707, %v711
    %v713 = vmul.f32 %v710, %v711
    %v714 = vsub.f32 %v703, %v712
    %v715 = vsub.f32 %v704, %v713
    %v716 = vmul.f32 %v714, %v714
    %v717 = vmul.f32 %v715, %v715
    %v718 = vsel %vm145, %v716, 0.0
    %719 = vadd.xlane.f32.xlu0 %v718
    %v720 = vpop.xlane.xlu0 %719
    %v721 = vsel %vm145, %v717, 0.0
    %722 = vadd.xlane.f32.xlu0 %v721
    %v723 = vpop.xlane.xlu0 %722
    %v724 = vmul.f32 %v720, %v711
    %v725 = vmul.f32 %v723, %v711
    %v726 = vadd.f32 %v724, 1e-05
    %v727 = vadd.f32 %v725, 1e-05
    %v728 = vrsqrt.pop %v726
    %v729 = vrsqrt.pop %v727
    %v730 = vmul.f32 %v714, %v728
    %v731 = vmul.f32 %v715, %v729
    %v732 = vld [vmem:[%s11] sm:$0x1]
    %v734 = vlaneseq
    %v735 = vshrl.u32 %v734, 7
    %v736 = vsub.s32 0, %v735
    %v737 = vrot.slane %v732, %v736
    %v739 = vmul.f32 %v730, %v737
    %v740 = vmul.f32 %v731, %v737
    %v741 = vld [vmem:[%s12] sm:$0x1]
    %v743 = vlaneseq
    %v744 = vshrl.u32 %v743, 7
    %v745 = vsub.s32 0, %v744
    %v746 = vrot.slane %v741, %v745
    %v748 = vadd.f32 %v739, %v746
    %v749 = vadd.f32 %v740, %v746
    %v750 = vld [vmem:[#allocation10] sm:$0xff]
    %v751 = vld [vmem:[#allocation10 + $0x8] sm:$0xff]
    %v752 = vld [vmem:[#allocation10 + $0x10] sm:$0xff]
    %v753 = vld [vmem:[#allocation10 + $0x18] sm:$0xff]
    %v754 = vld [vmem:[%s14] sm:$0x1]
    %v756 = vlaneseq
    %v757 = vshrl.u32 %v756, 7
    %v758 = vsub.s32 0, %v757
    %v759 = vrot.slane %v754, %v758
    %v762 = vsel %vm145, %v748, 0
    %v765 = vsel %vm145, %v749, 0
    %767 = vmatprep.subr.mxu0 0.0
    %768 = vmatpush1.msra.mxu0 %v750
    %769 = vmatprep.subr.mxu0 0.0
    %770 = vmatpush1.msra.mxu0 %v751
    %771 = vmatprep.subr.mxu0 0.0
    %772 = vmatpush1.msra.mxu0 %v752
    %773 = vmatprep.subr.mxu0 0.0
    %774 = vmatpush1.msra.mxu0 %v753
    %775 = vmatprep.subr.mxu0 0.0
    %776 = vmatpush1.msra.mxu0 0.0
    %777 = vmatprep.subr.mxu0 0.0
    %778 = vmatpush1.msra.mxu0 0.0
    %779 = vmatprep.subr.mxu0 0.0
    %780 = vmatpush1.msra.mxu0 0.0
    %781 = vmatprep.subr.mxu0 0.0
    %782 = vmatpush1.msra.mxu0 0.0
    %783 = vmatprep.subr.mxu0 0.0
    %784 = vmatpush1.msra.mxu0 0.0
    %785 = vmatprep.subr.mxu0 0.0
    %786 = vmatpush1.msra.mxu0 0.0
    %787 = vmatprep.subr.mxu0 0.0
    %788 = vmatpush1.msra.mxu0 0.0
    %789 = vmatprep.subr.mxu0 0.0
    %790 = vmatpush1.msra.mxu0 0.0
    %791 = vmatprep.subr.mxu0 0.0
    %792 = vmatpush1.msra.mxu0 0.0
    %793 = vmatprep.subr.mxu0 0.0
    %794 = vmatpush1.msra.mxu0 0.0
    %795 = vmatprep.subr.mxu0 0.0
    %796 = vmatpush1.msra.mxu0 0.0
    %797 = vmatprep.subr.mxu0 0.0
    %798 = vmatpush1.msra.mxu0 0.0
    %799 = vmatprep.subr.mxu0 0.0
    %800 = vmatpush1.msra.mxu0 0.0
    %801 = vmatprep.subr.mxu0 0.0
    %802 = vmatpush1.msra.mxu0 0.0
    %803 = vmatprep.subr.mxu0 0.0
    %804 = vmatpush1.msra.mxu0 0.0
    %805 = vmatprep.subr.mxu0 0.0
    %806 = vmatpush1.msra.mxu0 0.0
    %807 = vmatprep.subr.mxu0 0.0
    %808 = vmatpush1.msra.mxu0 0.0
    %809 = vmatprep.subr.mxu0 0.0
    %810 = vmatpush1.msra.mxu0 0.0
    %811 = vmatprep.subr.mxu0 0.0
    %812 = vmatpush1.msra.mxu0 0.0
    %813 = vmatprep.subr.mxu0 0.0
    %814 = vmatpush1.msra.mxu0 0.0
    %815 = vmatprep.subr.mxu0 0.0
    %816 = vmatpush1.msra.mxu0 0.0
    %817 = vmatprep.subr.mxu0 0.0
    %818 = vmatpush1.msra.mxu0 0.0
    %819 = vmatprep.subr.mxu0 0.0
    %820 = vmatpush1.msra.mxu0 0.0
    %821 = vmatprep.subr.mxu0 0.0
    %822 = vmatpush1.msra.mxu0 0.0
    %823 = vmatprep.subr.mxu0 0.0
    %824 = vmatpush1.msra.mxu0 0.0
    %825 = vmatprep.subr.mxu0 0.0
    %826 = vmatpush1.msra.mxu0 0.0
    %827 = vmatprep.subr.mxu0 0.0
    %828 = vmatpush1.msra.mxu0 0.0
    %829 = vmatprep.subr.mxu0 0.0
    %830 = vmatpush1.msra.mxu0 0.0
    %831 = vmatprep.mubr.f32.mxu0 0.0
    %832 = vmatmul.mubr.f32.gmra.mrb[0].mxu0 %v762
    %v833 = vpop.f32.mrb[0].mxu0
    %v834 = vadd.f32 %v759, %v833
    %v835 = vpop.f32.mrb[0].mxu0
    %836 = vmatprep.mubr.f32.mxu0 0.0
    %837 = vmatmul.mubr.f32.gmra.mrb[0].mxu0 %v765
    %v838 = vpop.f32.mrb[0].mxu0
    %v839 = vadd.f32 %v759, %v838
    %v840 = vpop.f32.mrb[0].mxu0
    %841 = vdwg.mxu0
    %v842 = vadd.f32 %v834, %v748
    %v843 = vadd.f32 %v839, %v749
    %v844 = vld [vmem:[#allocation6] sm:$0xff]
    %v845 = vld [vmem:[#allocation6 + $0x8] sm:$0xff]
    %v846 = vld [vmem:[#allocation6 + $0x10] sm:$0xff]
    %v847 = vld [vmem:[#allocation6 + $0x18] sm:$0xff]
    %v849 = vsel %vm145, %v842, 0
    %v852 = vsel %vm145, %v843, 0
    %854 = vmatprep.subr.mxu0 0.0
    %855 = vmatpush1.msra.mxu0 %v844
    %856 = vmatprep.subr.mxu0 0.0
    %857 = vmatpush1.msra.mxu0 %v845
    %858 = vmatprep.subr.mxu0 0.0
    %859 = vmatpush1.msra.mxu0 %v846
    %860 = vmatprep.subr.mxu0 0.0
    %861 = vmatpush1.msra.mxu0 %v847
    %862 = vmatprep.subr.mxu0 0.0
    %863 = vmatpush1.msra.mxu0 0.0
    %864 = vmatprep.subr.mxu0 0.0
    %865 = vmatpush1.msra.mxu0 0.0
    %866 = vmatprep.subr.mxu0 0.0
    %867 = vmatpush1.msra.mxu0 0.0
    %868 = vmatprep.subr.mxu0 0.0
    %869 = vmatpush1.msra.mxu0 0.0
    %870 = vmatprep.subr.mxu0 0.0
    %871 = vmatpush1.msra.mxu0 0.0
    %872 = vmatprep.subr.mxu0 0.0
    %873 = vmatpush1.msra.mxu0 0.0
    %874 = vmatprep.subr.mxu0 0.0
    %875 = vmatpush1.msra.mxu0 0.0
    %876 = vmatprep.subr.mxu0 0.0
    %877 = vmatpush1.msra.mxu0 0.0
    %878 = vmatprep.subr.mxu0 0.0
    %879 = vmatpush1.msra.mxu0 0.0
    %880 = vmatprep.subr.mxu0 0.0
    %881 = vmatpush1.msra.mxu0 0.0
    %882 = vmatprep.subr.mxu0 0.0
    %883 = vmatpush1.msra.mxu0 0.0
    %884 = vmatprep.subr.mxu0 0.0
    %885 = vmatpush1.msra.mxu0 0.0
    %886 = vmatprep.subr.mxu0 0.0
    %887 = vmatpush1.msra.mxu0 0.0
    %888 = vmatprep.subr.mxu0 0.0
    %889 = vmatpush1.msra.mxu0 0.0
    %890 = vmatprep.subr.mxu0 0.0
    %891 = vmatpush1.msra.mxu0 0.0
    %892 = vmatprep.subr.mxu0 0.0
    %893 = vmatpush1.msra.mxu0 0.0
    %894 = vmatprep.subr.mxu0 0.0
    %895 = vmatpush1.msra.mxu0 0.0
    %896 = vmatprep.subr.mxu0 0.0
    %897 = vmatpush1.msra.mxu0 0.0
    %898 = vmatprep.subr.mxu0 0.0
    %899 = vmatpush1.msra.mxu0 0.0
    %900 = vmatprep.subr.mxu0 0.0
    %901 = vmatpush1.msra.mxu0 0.0
    %902 = vmatprep.subr.mxu0 0.0
    %903 = vmatpush1.msra.mxu0 0.0
    %904 = vmatprep.subr.mxu0 0.0
    %905 = vmatpush1.msra.mxu0 0.0
    %906 = vmatprep.subr.mxu0 0.0
    %907 = vmatpush1.msra.mxu0 0.0
    %908 = vmatprep.subr.mxu0 0.0
    %909 = vmatpush1.msra.mxu0 0.0
    %910 = vmatprep.subr.mxu0 0.0
    %911 = vmatpush1.msra.mxu0 0.0
    %912 = vmatprep.subr.mxu0 0.0
    %913 = vmatpush1.msra.mxu0 0.0
    %914 = vmatprep.subr.mxu0 0.0
    %915 = vmatpush1.msra.mxu0 0.0
    %916 = vmatprep.subr.mxu0 0.0
    %917 = vmatpush1.msra.mxu0 0.0
    %918 = vmatprep.mubr.f32.mxu0 0.0
    %919 = vmatmul.mubr.f32.gmra.mrb[0].mxu0 %v849
    %v920 = vpop.f32.mrb[0].mxu0
    %v921 = vadd.f32 0.0, %v920
    %v922 = vpop.f32.mrb[0].mxu0
    %923 = vmatprep.mubr.f32.mxu0 0.0
    %924 = vmatmul.mubr.f32.gmra.mrb[0].mxu0 %v852
    %v925 = vpop.f32.mrb[0].mxu0
    %v926 = vadd.f32 0.0, %v925
    %v927 = vpop.f32.mrb[0].mxu0
    %928 = vdwg.mxu0
    %v929 = vld [vmem:[#allocation7] sm:$0xff]
    %v930 = vld [vmem:[#allocation7 + $0x8] sm:$0xff]
    %v931 = vmul.f32 %v921, %v929
    %v932 = vmul.f32 %v926, %v930
    %v933 = vld [vmem:[%s8] sm:$0xf]
    %vm934 = vcmask 130048
    %v936 = vsel %vm934, %v933, 0
    %938 = vmatprep.subr.mxu0 0.0
    %939 = vmatpush1.msra.mxu0 %v931
    %940 = vmatprep.subr.mxu0 0.0
    %941 = vmatpush1.msra.mxu0 %v932
    %942 = vmatprep.subr.mxu0 0.0
    %943 = vmatpush1.msra.mxu0 0.0
    %944 = vmatprep.subr.mxu0 0.0
    %945 = vmatpush1.msra.mxu0 0.0
    %946 = vmatprep.subr.mxu0 0.0
    %947 = vmatpush1.msra.mxu0 0.0
    %948 = vmatprep.subr.mxu0 0.0
    %949 = vmatpush1.msra.mxu0 0.0
    %950 = vmatprep.subr.mxu0 0.0
    %951 = vmatpush1.msra.mxu0 0.0
    %952 = vmatprep.subr.mxu0 0.0
    %953 = vmatpush1.msra.mxu0 0.0
    %954 = vmatprep.subr.mxu0 0.0
    %955 = vmatpush1.msra.mxu0 0.0
    %956 = vmatprep.subr.mxu0 0.0
    %957 = vmatpush1.msra.mxu0 0.0
    %958 = vmatprep.subr.mxu0 0.0
    %959 = vmatpush1.msra.mxu0 0.0
    %960 = vmatprep.subr.mxu0 0.0
    %961 = vmatpush1.msra.mxu0 0.0
    %962 = vmatprep.subr.mxu0 0.0
    %963 = vmatpush1.msra.mxu0 0.0
    %964 = vmatprep.subr.mxu0 0.0
    %965 = vmatpush1.msra.mxu0 0.0
    %966 = vmatprep.subr.mxu0 0.0
    %967 = vmatpush1.msra.mxu0 0.0
    %968 = vmatprep.subr.mxu0 0.0
    %969 = vmatpush1.msra.mxu0 0.0
    %970 = vmatprep.subr.mxu0 0.0
    %971 = vmatpush1.msra.mxu0 0.0
    %972 = vmatprep.subr.mxu0 0.0
    %973 = vmatpush1.msra.mxu0 0.0
    %974 = vmatprep.subr.mxu0 0.0
    %975 = vmatpush1.msra.mxu0 0.0
    %976 = vmatprep.subr.mxu0 0.0
    %977 = vmatpush1.msra.mxu0 0.0
    %978 = vmatprep.subr.mxu0 0.0
    %979 = vmatpush1.msra.mxu0 0.0
    %980 = vmatprep.subr.mxu0 0.0
    %981 = vmatpush1.msra.mxu0 0.0
    %982 = vmatprep.subr.mxu0 0.0
    %983 = vmatpush1.msra.mxu0 0.0
    %984 = vmatprep.subr.mxu0 0.0
    %985 = vmatpush1.msra.mxu0 0.0
    %986 = vmatprep.subr.mxu0 0.0
    %987 = vmatpush1.msra.mxu0 0.0
    %988 = vmatprep.subr.mxu0 0.0
    %989 = vmatpush1.msra.mxu0 0.0
    %990 = vmatprep.subr.mxu0 0.0
    %991 = vmatpush1.msra.mxu0 0.0
    %992 = vmatprep.subr.mxu0 0.0
    %993 = vmatpush1.msra.mxu0 0.0
    %994 = vmatprep.subr.mxu0 0.0
    %995 = vmatpush1.msra.mxu0 0.0
    %996 = vmatprep.subr.mxu0 0.0
    %997 = vmatpush1.msra.mxu0 0.0
    %998 = vmatprep.subr.mxu0 0.0
    %999 = vmatpush1.msra.mxu0 0.0
    %1000 = vmatprep.subr.mxu0 0.0
    %1001 = vmatpush1.msra.mxu0 0.0
    %1002 = vmatprep.mubr.f32.mxu0 0.0
    %1003 = vmatmul.mubr.f32.gmra.mrb[0].mxu0 %v936
    %v1004 = vpop.f32.mrb[0].mxu0
    %v1005 = vadd.f32 0.0, %v1004
    %v1006 = vpop.f32.mrb[0].mxu0
    %1007 = vdwg.mxu0
    %1008 = vst [vmem:[%s15] sm:$0xf] %v1005
    // Predicated region
    $region86: #{encoder_block_pallas.1} parent=1 // pred_check
      _
    $region87: #{encoder_block_pallas.1} parent=1 // pred_check_branch
      %1010 = sbr.rel (0) target = $region89
    $region88: #{encoder_block_pallas.1} parent=1 // pred_region
      _
    $region89: #{encoder_block_pallas.1} parent=1 // pred_fallthru
      _
    // Predicated region
    $region90: #{encoder_block_pallas.1} parent=1 // pred_check
      _
    $region91: #{encoder_block_pallas.1} parent=1 // pred_check_branch
      %1012 = sbr.rel (0) target = $region93
    $region92: #{encoder_block_pallas.1} parent=1 // pred_region
      _
    $region93: #{encoder_block_pallas.1} parent=1 // pred_fallthru
      _
    %1013 = vsyncpa [#allocation3], 1
    %1014 = vsyncpa [#allocation5], 1
    %1015 = vsyncpa [#allocation8], 1
    %1016 = vsyncpa [#allocation11], 1

</llo_original>
